<compile_context>
chip_gen: v5e
topology: v5e:2x2
jax: 0.10.0
libtpu: 0.0.40
codegen_flags: <defaults>
</compile_context>

<pallas_src>
import jax
import jax.numpy as jnp
from jax.experimental import pallas as pl
from jax.experimental.pallas import tpu as pltpu


def _round_up(v, m):
    return ((v + m - 1) // m) * m


def linear_kernel(params_ref, x_ref, o_ref):
    # params_ref: (3,) f32 in SMEM  -> [w00, w01, bias]
    # x_ref:      (TN, 2) f32 block of x (batch on the sublane axis)
    # o_ref:      (TN, 1) f32 block of y
    w0 = params_ref[0]
    w1 = params_ref[1]
    b = params_ref[2]
    x = x_ref[...]                                   # (TN, 2)
    y = x[:, 0:1] * w0 + x[:, 1:2] * w1 + b          # pure VPU FMA in f32
    o_ref[...] = y.astype(o_ref.dtype)               # single store per block


def pack_params(weight, bias):
    """Pack Linear(2,1) params once: [w00, w01, bias] as a (3,) f32 array."""
    return jnp.concatenate([weight.reshape(-1), bias.reshape(-1)]).astype(jnp.float32)


def linear_pallas(x, params, *, block_n=512):
    """x: (N, 2) f32, params: (3,) f32 packed -> (N, 1).  torch.nn.Linear(2,1) fwd."""
    n, in_f = x.shape
    assert in_f == 2 and params.shape == (3,), "kernel specialized to Linear(2, 1)"
    out_f = 1

    # Tile the batch axis; keep the sublane dim a multiple of 8.
    tn = min(block_n, max(8, _round_up(n, 8)))
    grid = (pl.cdiv(n, tn),)

    flops = 2 * n * in_f * out_f
    bytes_accessed = (x.size + params.size + n * out_f) * 4   # honest: no transpose pass
    cost = pl.CostEstimate(flops=flops, transcendentals=0, bytes_accessed=bytes_accessed)

    return pl.pallas_call(
        linear_kernel,
        out_shape=jax.ShapeDtypeStruct((n, out_f), x.dtype),
        grid=grid,
        in_specs=[
            pl.BlockSpec(memory_space=pltpu.MemorySpace.SMEM),   # packed params (scalars)
            pl.BlockSpec((tn, in_f), lambda i: (i, 0)),          # x block, natural layout
        ],
        out_specs=pl.BlockSpec((tn, out_f), lambda i: (i, 0)),   # y block
        compiler_params=pltpu.CompilerParams(
            dimension_semantics=("parallel",)),                  # 2 TCs on v7x
        cost_estimate=cost,
    )(params, x)


def model_forward(x, weight, bias, *, min_pallas_rows=4096):
    """Model.forward.  For tiny batches fused XLA is strictly faster (dispatch-
    bound regime); the Pallas kernel is used only at scale."""
    if x.shape[0] < min_pallas_rows:
        return x @ weight.T + bias
    return linear_pallas(x, pack_params(weight, bias))


if __name__ == "__main__":
    # Deterministic parameter init (mimics torch.nn.Linear uniform(-1/sqrt(in), 1/sqrt(in)))
    key = jax.random.PRNGKey(0)
    k_w, k_b, k_x = jax.random.split(key, 3)
    in_features, out_features = 2, 1
    bound = 1.0 / (in_features ** 0.5)
    weight = jax.random.uniform(
        k_w, (out_features, in_features), jnp.float32, minval=-bound, maxval=bound
    )
    bias = jax.random.uniform(
        k_b, (out_features,), jnp.float32, minval=-bound, maxval=bound
    )
    params = pack_params(weight, bias)   # packed once, reused across calls

    # Exact input from the reference module (N=4).
    x_small = jnp.array([[0.0, 0.0], [0.0, 1.0], [1.0, 0.0], [1.0, 1.0]],
                        dtype=jnp.float32)
    y_small = linear_pallas(x_small, params)
    jax.block_until_ready(y_small)
    y_small_ref = x_small @ weight.T + bias
    assert y_small.shape == (4, 1), y_small.shape
    assert jnp.allclose(y_small, y_small_ref, atol=1e-6), (y_small, y_small_ref)

    # Larger batch to exercise the pipelined, parallel grid path (2 grid steps).
    x_big = jax.random.normal(k_x, (1024, in_features), jnp.float32)
    y_big = linear_pallas(x_big, params, block_n=512)
    jax.block_until_ready(y_big)
    y_big_ref = x_big @ weight.T + bias
    assert y_big.shape == (1024, 1), y_big.shape
    assert jnp.allclose(y_big, y_big_ref, atol=1e-5), "large-batch mismatch"

    # Dispatcher path: tiny N bypasses Pallas entirely (fused XLA).
    y_disp = model_forward(x_small, weight, bias)
    jax.block_until_ready(y_disp)
    assert jnp.allclose(y_disp, y_small_ref, atol=1e-6)

    print("KERNEL_OK")
</pallas_src>

<mosaic_0001>
module attributes {stable_mosaic.version = 11 : i64} {
  func.func @linear_kernel(%arg0: i32, %arg1: memref<3xf32, #tpu.memory_space<smem>>, %arg2: memref<8x2xf32, #tpu.memory_space<vmem>>, %arg3: memref<8x1xf32, #tpu.memory_space<vmem>>) attributes {dimension_semantics = [#tpu.dimension_semantics<parallel>], iteration_bounds = array<i64: 1>, scalar_prefetch = 0 : i64, scratch_operands = 0 : i64, tpu.core_type = #tpu.core_type<tc>, window_params = [{transform_indices = @transform_0, window_bounds = array<i64: 3>}, {transform_indices = @transform_1, window_bounds = array<i64: 8, 2>}, {transform_indices = @transform_2, window_bounds = array<i64: 8, 1>}]} {
    %c0 = arith.constant 0 : index
    %0 = memref.load %arg1[%c0] : memref<3xf32, #tpu.memory_space<smem>>
    %c1 = arith.constant 1 : index
    %1 = memref.load %arg1[%c1] : memref<3xf32, #tpu.memory_space<smem>>
    %c2 = arith.constant 2 : index
    %2 = memref.load %arg1[%c2] : memref<3xf32, #tpu.memory_space<smem>>
    %c0_0 = arith.constant 0 : index
    %c0_1 = arith.constant 0 : index
    %3 = vector.load %arg2[%c0_0, %c0_1] : memref<8x2xf32, #tpu.memory_space<vmem>>, vector<8x2xf32>
    %4 = vector.extract_strided_slice %3 {offsets = [0, 0], sizes = [8, 1], strides = [1, 1]} : vector<8x2xf32> to vector<8x1xf32>
    %5 = vector.broadcast %0 : f32 to vector<8x1xf32>
    %6 = arith.mulf %4, %5 : vector<8x1xf32>
    %7 = vector.extract_strided_slice %3 {offsets = [0, 1], sizes = [8, 1], strides = [1, 1]} : vector<8x2xf32> to vector<8x1xf32>
    %8 = vector.broadcast %1 : f32 to vector<8x1xf32>
    %9 = arith.mulf %7, %8 : vector<8x1xf32>
    %10 = arith.addf %6, %9 : vector<8x1xf32>
    %11 = vector.broadcast %2 : f32 to vector<8x1xf32>
    %12 = arith.addf %10, %11 : vector<8x1xf32>
    %c0_2 = arith.constant 0 : index
    %c0_3 = arith.constant 0 : index
    %13 = vector.load %arg3[%c0_2, %c0_3] : memref<8x1xf32, #tpu.memory_space<vmem>>, vector<8x1xf32>
    tpu.vector_store %arg3[%c0_2, %c0_3], %12 {strides = array<i32>} : memref<8x1xf32, #tpu.memory_space<vmem>>, vector<8x1xf32>,
    return
  }
  func.func @transform_0(%arg0: i32) -> i32 {
    %c0_i32 = arith.constant 0 : i32
    %c0_i32_0 = arith.constant 0 : i32
    return %c0_i32 : i32
  }
  func.func @transform_1(%arg0: i32) -> (i32, i32) {
    %c0_i32 = arith.constant 0 : i32
    %c0_i32_0 = arith.constant 0 : i32
    return %arg0, %c0_i32 : i32, i32
  }
  func.func @transform_2(%arg0: i32) -> (i32, i32) {
    %c0_i32 = arith.constant 0 : i32
    %c0_i32_0 = arith.constant 0 : i32
    return %arg0, %c0_i32 : i32, i32
  }
}

</mosaic_0001>

<llo_original>
// kernel: tpu_custom_call.1
$region0: #{tpu_custom_call.1}
  #allocation0 [shape = 'u32[]', space=smem, size = 0x4, offset = 0x4, fixed_abs, tag = 'smem constant byte address 0x4 - core index']
  #allocation1 [shape = 'u32[72,128]{1,0:T(1,128)}', space=vmem, size = 0x9000, scoped, tag = 'internal scratch']
  %s0 = inlined_call_operand.vmem [shape: f32[3], index: 0, kind: input, shape index: {}]
  %s1 = inlined_call_operand.vmem [shape: f32[4,2], index: 1, kind: input, shape index: {}]
  %s2 = inlined_call_operand.vmem [shape: f32[4,1], index: 2, kind: output, shape index: {}]
  %s3 = sld [smem:[#allocation0]]
  $region52: #{tpu_custom_call.1} parent=0
    _
  %s5 = ssub.s32 1, %s3
  %s6 = scalar_select 0, %s5, %s3
  $region1: #{tpu_custom_call.1} parent=0
    #allocation2 [shape = 'u8[512]{0}', space=smem, size = 0x200, scoped, tag = 'input window, operand 0, single buffered']
    #allocation3 [shape = 's32[1]{0}', space=sflag, size = 0x4, scoped, tag = 'scoped memory for tpu_custom_call.1']
    #allocation4 [shape = 'u8[4096]{0}', space=vmem, size = 0x1000, scoped, tag = 'output window, operand 0, single buffered']
    %7 = vsyncpa [#allocation3], 0
    // Predicated region
    $region2: #{tpu_custom_call.1} parent=1 // pred_check
      _
    $region3: #{tpu_custom_call.1} parent=1 // pred_check_branch
      %9 = sbr.rel (0) target = $region5
    $region4: #{tpu_custom_call.1} parent=1 // pred_region
      %11 = vsyncadd [#allocation3], 0
      %s13 = sshll.u32 %s0, 4
      %s14 = int_to_ptr.vmem [resolvable:$true] %s13
      %16 = dma.vmem_to_smem %s14, 16, [#allocation2], [#allocation3]
    $region5: #{tpu_custom_call.1} parent=1 // pred_fallthru
      _
    // Predicated region
    $region6: #{tpu_custom_call.1} parent=1 // pred_check
      _
    $region7: #{tpu_custom_call.1} parent=1 // pred_check_branch
      %18 = sbr.rel (0) target = $region9
    $region8: #{tpu_custom_call.1} parent=1 // pred_region
      _
    $region9: #{tpu_custom_call.1} parent=1 // pred_fallthru
      _
    // Predicated region
    $region10: #{tpu_custom_call.1} parent=1 // pred_check
      _
    $region11: #{tpu_custom_call.1} parent=1 // pred_check_branch
      %20 = sbr.rel (0) target = $region13
    $region12: #{tpu_custom_call.1} parent=1 // pred_region
      %22 = dma.done [#allocation3], 16
    $region13: #{tpu_custom_call.1} parent=1 // pred_fallthru
      _
    %23 = sfence
    %s24 = sld [smem:[#allocation2]]
    %s25 = sld [smem:[#allocation2 + $0x1]]
    %s26 = sld [smem:[#allocation2 + $0x2]]
    %v27 = vld [vmem:[%s1] sm:$0xff]
    %v28 = vstv %s24
    %v29 = vmul.f32 %v27, %v28
    %v30 = vstv %s25
    %v31 = vmul.f32 %v27, %v30
    %33 = vrot.lane.b32.xlu0 %v31, 127
    %v34 = vpop.permute.xlu0 %33
    %v36 = vadd.f32 %v29, %v34
    %v37 = vstv %s26
    %v38 = vadd.f32 %v36, %v37
    %vm39 = vcmask 7168
    %40 = vst.msk [vmem:[#allocation4] sm:$0xff] %vm39, %v38
    // Predicated region
    $region14: #{tpu_custom_call.1} parent=1 // pred_check
      _
    $region15: #{tpu_custom_call.1} parent=1 // pred_check_branch
      %42 = sbr.rel (0) target = $region17
    $region16: #{tpu_custom_call.1} parent=1 // pred_region
      // Predicated region
      $region18: #{tpu_custom_call.1} parent=16 // pred_check
        _
      $region19: #{tpu_custom_call.1} parent=16 // pred_check_branch
        %44 = sbr.rel (0) target = $region21
      $region20: #{tpu_custom_call.1} parent=16 // pred_region
        // Predicated region
        $region22: #{tpu_custom_call.1} parent=20 // pred_check
          _
        $region23: #{tpu_custom_call.1} parent=20 // pred_check_branch
          %46 = sbr.rel target = $region25
        $region24: #{tpu_custom_call.1} parent=20 // pred_region
          // Predicated region
          $region37: #{tpu_custom_call.1} parent=24 // pred_check
            _
          $region38: #{tpu_custom_call.1} parent=24 // pred_check_branch
            %62 = sbr.rel (0) target = $region40
          $region39: #{tpu_custom_call.1} parent=24 // pred_region
            %s64 = ssub.s32 16, 1
            loop: start=0, step=1, limit=1
            $region41: #{tpu_custom_call.1} parent=39 // loop_pre_header
              _
            $region42: #{tpu_custom_call.1} parent=39 // loop_header
              %s66 = sphi 0, %s70
              %p67 = scmp.ge.s32.totalorder %s66, 1
              %s71 = sphi [#allocation4], [#allocation4]
              %s72 = sphi %s2, %s2
            $region43: #{tpu_custom_call.1} parent=39 // loop_header_branch
              %69 = sbr.rel (%p67) target = $region47
            $region44: #{tpu_custom_call.1} parent=39 // loop_body
              %v73 = vld [vmem:[%s71] sm:%s64]
              %74 = vst [vmem:[%s72] sm:%s64] %v73
            $region45: #{tpu_custom_call.1} parent=39 // loop_footer
              %s70 = sadd.s32 1, %s66
            $region46: #{tpu_custom_call.1} parent=39 // loop_footer_branch
              %65 = sbr.rel target = $region42
            $region47: #{tpu_custom_call.1} parent=39 // loop_exit
              _
          $region40: #{tpu_custom_call.1} parent=24 // pred_fallthru
            _
        $region25: #{tpu_custom_call.1} parent=20 // pred_fallthru
          _
        // Predicated region
        $region26: #{tpu_custom_call.1} parent=20 // pred_check
          _
        $region27: #{tpu_custom_call.1} parent=20 // pred_check_branch
          %48 = sbr.rel (0) target = $region29
        $region28: #{tpu_custom_call.1} parent=20 // pred_region
          %s50 = ssub.s32 16, 1
          loop: start=0, step=1, limit=1
          $region30: #{tpu_custom_call.1} parent=28 // loop_pre_header
            _
          $region31: #{tpu_custom_call.1} parent=28 // loop_header
            %s52 = sphi 0, %s56
            %p53 = scmp.ge.s32.totalorder %s52, 1
            %s57 = sphi [#allocation4], [#allocation4]
            %s58 = sphi %s2, %s2
          $region32: #{tpu_custom_call.1} parent=28 // loop_header_branch
            %55 = sbr.rel (%p53) target = $region36
          $region33: #{tpu_custom_call.1} parent=28 // loop_body
            %v59 = vld [vmem:[%s57] sm:%s50]
            %60 = vst [vmem:[%s58] sm:%s50] %v59
          $region34: #{tpu_custom_call.1} parent=28 // loop_footer
            %s56 = sadd.s32 1, %s52
          $region35: #{tpu_custom_call.1} parent=28 // loop_footer_branch
            %51 = sbr.rel target = $region31
          $region36: #{tpu_custom_call.1} parent=28 // loop_exit
            _
        $region29: #{tpu_custom_call.1} parent=20 // pred_fallthru
          _
      $region21: #{tpu_custom_call.1} parent=16 // pred_fallthru
        _
      %75 = vnop
    $region17: #{tpu_custom_call.1} parent=1 // pred_fallthru
      _
    // Predicated region
    $region48: #{tpu_custom_call.1} parent=1 // pred_check
      _
    $region49: #{tpu_custom_call.1} parent=1 // pred_check_branch
      %77 = sbr.rel (0) target = $region51
    $region50: #{tpu_custom_call.1} parent=1 // pred_region
      _
    $region51: #{tpu_custom_call.1} parent=1 // pred_fallthru
      _
    %78 = vsyncpa [#allocation3], 1

</llo_original>
